<compile_context>
chip_gen: v5e
topology: v5e:2x2
jax: 0.10.0
libtpu: 0.0.40
codegen_flags: <defaults>
</compile_context>

<pallas_src>
import functools

import jax
import jax.numpy as jnp
from jax.experimental import pallas as pl
from jax.experimental.pallas import tpu as pltpu


def _round_up(x, m):
    return ((x + m - 1) // m) * m


# ---------------- Pallas kernel (fused MLP hot path) ----------------

def _make_mlp_kernel(num_layers):
    """Builds a kernel: (x_ref, w0, b0, w1, b1, ..., out_ref) -> fused MLP."""

    def kernel(x_ref, *refs):
        out_ref = refs[-1]
        wb_refs = refs[:-1]
        h = x_ref[...]
        for l in range(num_layers):                 # unrolled at trace time
            w = wb_refs[2 * l][...]
            b = wb_refs[2 * l + 1][...]             # (1, d_out) -> broadcasts
            h = jnp.dot(h, w, preferred_element_type=jnp.float32) + b
            if l != num_layers - 1:
                h = jnp.maximum(h, 0.0)             # ReLU between layers only
        out_ref[...] = h.astype(out_ref.dtype)

    return kernel


def _pick_row_tile(n):
    """Row tile: big enough to amortize per-step overhead, but keep >=2 grid
    steps so the 'parallel' axis can split across v7x's two TensorCores."""
    if n >= 2048:
        return 1024
    return max(8, _round_up(-(-n // 2), 8))   # ~half of N, multiple of 8


# ---------------- wrapper ----------------

@functools.partial(jax.jit, static_argnames=("row_tile",))
def mlp_forward(x, weights, biases, *, row_tile=None):
    """Fused MLP forward.  x: [N, in_feats]; weights[l]: [d_l, d_{l+1}]."""
    num_layers = len(weights)
    if num_layers == 0:
        # num_layers == 0 -> module has no layers, forward returns input as-is.
        return x

    N, f_in = x.shape
    dims = [f_in] + [int(w.shape[1]) for w in weights]

    if row_tile is None:
        row_tile = _pick_row_tile(N)
    grid = (pl.cdiv(N, row_tile),)

    # --- VMEM budget guard (v7x: 64 MiB VMEM / 32 MiB scoped default; v5e
    # scoped default is only 16 MiB).  Weights are held resident for the whole
    # call; activations/x/out blocks are double-buffered. ---
    w_bytes = sum(dims[l] * dims[l + 1] * 4 + dims[l + 1] * 4
                  for l in range(num_layers))
    vmem_bytes = (2 * w_bytes
                  + 2 * row_tile * (f_in + dims[-1]) * 4     # x / out blocks
                  + 2 * row_tile * max(dims) * 4)            # in-kernel activations
    assert vmem_bytes < 12 * 1024 * 1024, (
        f"MLP working set (~{vmem_bytes / 2**20:.1f} MiB) may exceed scoped VMEM"
    )  # TODO(synk): add K/N weight tiling fallback for large hidden dims.

    # Unpadded, full-last-dim blocks everywhere (no lane padding, no wrapper
    # pad/slice).  Weights/biases use a constant block index -> loaded once.
    in_specs = [pl.BlockSpec((row_tile, f_in), lambda i: (i, 0))]
    flat_params = []
    for l, (w, b) in enumerate(zip(weights, biases)):
        d_in, d_out = dims[l], dims[l + 1]
        in_specs.append(pl.BlockSpec((d_in, d_out), lambda i: (0, 0)))
        in_specs.append(pl.BlockSpec((1, d_out), lambda i: (0, 0)))
        flat_params += [w, b.reshape(1, -1)]

    out = pl.pallas_call(
        _make_mlp_kernel(num_layers),
        out_shape=jax.ShapeDtypeStruct((N, dims[-1]), jnp.float32),
        grid=grid,
        in_specs=in_specs,
        out_specs=pl.BlockSpec((row_tile, dims[-1]), lambda i: (i, 0)),
        compiler_params=pltpu.CompilerParams(
            dimension_semantics=("parallel",)),   # rows independent -> megacore
    )(x, *flat_params)

    return out


# ---------------- parameter init (deterministic, synthetic) ----------------

def init_params(key, in_feats, h_feats=32, num_classes=2, num_layers=2):
    """PyTorch nn.Linear-style init: U(-1/sqrt(fan_in), 1/sqrt(fan_in))."""
    if num_layers == 0:
        return (), ()
    if num_layers == 1:
        dims = [in_feats, num_classes]
    else:
        dims = [in_feats] + [h_feats] * (num_layers - 1) + [num_classes]

    weights, biases = [], []
    for l in range(num_layers):
        key, kw, kb = jax.random.split(key, 3)
        fan_in, fan_out = dims[l], dims[l + 1]
        bound = 1.0 / jnp.sqrt(jnp.float32(fan_in))
        w = jax.random.uniform(kw, (fan_in, fan_out), jnp.float32, -bound, bound)
        b = jax.random.uniform(kb, (fan_out,), jnp.float32, -bound, bound)
        weights.append(w)
        biases.append(b)
    return tuple(weights), tuple(biases)


# ---------------- demo ----------------

if __name__ == "__main__":
    N = 256            # rows (nodes / batch of feature vectors)
    in_feats = 16
    h_feats = 32       # module default
    num_classes = 2    # module default
    num_layers = 2     # module default

    key = jax.random.PRNGKey(0)
    k_x, k_p = jax.random.split(key)

    # is_graph=True in the reference just extracts h.ndata['feature'];
    # here we pass the node-feature matrix directly.
    x = jax.random.normal(k_x, (N, in_feats), jnp.float32)
    weights, biases = init_params(k_p, in_feats, h_feats, num_classes, num_layers)

    out = mlp_forward(x, weights, biases)
    out = jax.block_until_ready(out)
    assert out.shape == (N, num_classes)

    # reference check in plain JAX
    h_ref = x
    for l, (w, b) in enumerate(zip(weights, biases)):
        h_ref = h_ref @ w + b
        if l != num_layers - 1:
            h_ref = jnp.maximum(h_ref, 0.0)
    assert jnp.allclose(out, h_ref, atol=1e-4, rtol=1e-4)

    print("KERNEL_OK")
</pallas_src>

<mosaic_0001>
module attributes {stable_mosaic.version = 11 : i64} {
  func.func @kernel(%arg0: i32, %arg1: memref<128x16xf32, #tpu.memory_space<vmem>>, %arg2: memref<16x32xf32, #tpu.memory_space<vmem>>, %arg3: memref<1x32xf32, #tpu.memory_space<vmem>>, %arg4: memref<32x2xf32, #tpu.memory_space<vmem>>, %arg5: memref<1x2xf32, #tpu.memory_space<vmem>>, %arg6: memref<128x2xf32, #tpu.memory_space<vmem>>) attributes {dimension_semantics = [#tpu.dimension_semantics<parallel>], iteration_bounds = array<i64: 2>, scalar_prefetch = 0 : i64, scratch_operands = 0 : i64, tpu.core_type = #tpu.core_type<tc>, window_params = [{transform_indices = @transform_0, window_bounds = array<i64: 128, 16>}, {pipeline_mode = #tpu.pipeline_mode<synchronous>, transform_indices = @transform_1, window_bounds = array<i64: 16, 32>}, {pipeline_mode = #tpu.pipeline_mode<synchronous>, transform_indices = @transform_2, window_bounds = array<i64: 1, 32>}, {pipeline_mode = #tpu.pipeline_mode<synchronous>, transform_indices = @transform_3, window_bounds = array<i64: 32, 2>}, {pipeline_mode = #tpu.pipeline_mode<synchronous>, transform_indices = @transform_4, window_bounds = array<i64: 1, 2>}, {transform_indices = @transform_5, window_bounds = array<i64: 128, 2>}]} {
    %c0 = arith.constant 0 : index
    %c0_0 = arith.constant 0 : index
    %0 = vector.load %arg1[%c0, %c0_0] : memref<128x16xf32, #tpu.memory_space<vmem>>, vector<128x16xf32>
    %c0_1 = arith.constant 0 : index
    %c0_2 = arith.constant 0 : index
    %1 = vector.load %arg2[%c0_1, %c0_2] : memref<16x32xf32, #tpu.memory_space<vmem>>, vector<16x32xf32>
    %c0_3 = arith.constant 0 : index
    %c0_4 = arith.constant 0 : index
    %2 = vector.load %arg3[%c0_3, %c0_4] : memref<1x32xf32, #tpu.memory_space<vmem>>, vector<1x32xf32>
    %cst = arith.constant dense<0.000000e+00> : vector<128x32xf32>
    %3 = tpu.matmul %0, %1, %cst {dimension_numbers = #tpu.dot_dimension_numbers<[1], [0], [0], [1], [0, 0, 1, 1], [], []>} : vector<128x16xf32>, vector<16x32xf32>, vector<128x32xf32> -> vector<128x32xf32>
    %4 = vector.broadcast %2 : vector<1x32xf32> to vector<128x32xf32>
    %5 = arith.addf %3, %4 : vector<128x32xf32>
    %cst_5 = arith.constant 0.000000e+00 : f32
    %6 = vector.broadcast %cst_5 : f32 to vector<128x32xf32>
    %7 = arith.maximumf %5, %6 : vector<128x32xf32>
    %c0_6 = arith.constant 0 : index
    %c0_7 = arith.constant 0 : index
    %8 = vector.load %arg4[%c0_6, %c0_7] : memref<32x2xf32, #tpu.memory_space<vmem>>, vector<32x2xf32>
    %c0_8 = arith.constant 0 : index
    %c0_9 = arith.constant 0 : index
    %9 = vector.load %arg5[%c0_8, %c0_9] : memref<1x2xf32, #tpu.memory_space<vmem>>, vector<1x2xf32>
    %cst_10 = arith.constant dense<0.000000e+00> : vector<128x2xf32>
    %10 = tpu.matmul %7, %8, %cst_10 {dimension_numbers = #tpu.dot_dimension_numbers<[1], [0], [0], [1], [0, 0, 1, 1], [], []>} : vector<128x32xf32>, vector<32x2xf32>, vector<128x2xf32> -> vector<128x2xf32>
    %11 = vector.broadcast %9 : vector<1x2xf32> to vector<128x2xf32>
    %12 = arith.addf %10, %11 : vector<128x2xf32>
    %c0_11 = arith.constant 0 : index
    %c0_12 = arith.constant 0 : index
    %13 = vector.load %arg6[%c0_11, %c0_12] : memref<128x2xf32, #tpu.memory_space<vmem>>, vector<128x2xf32>
    tpu.vector_store %arg6[%c0_11, %c0_12], %12 {strides = array<i32>} : memref<128x2xf32, #tpu.memory_space<vmem>>, vector<128x2xf32>,
    return
  }
  func.func @transform_0(%arg0: i32) -> (i32, i32) {
    %c0_i32 = arith.constant 0 : i32
    %c0_i32_0 = arith.constant 0 : i32
    return %arg0, %c0_i32 : i32, i32
  }
  func.func @transform_1(%arg0: i32) -> (i32, i32) {
    %c0_i32 = arith.constant 0 : i32
    %c0_i32_0 = arith.constant 0 : i32
    %c0_i32_1 = arith.constant 0 : i32
    return %c0_i32, %c0_i32_0 : i32, i32
  }
  func.func @transform_2(%arg0: i32) -> (i32, i32) {
    %c0_i32 = arith.constant 0 : i32
    %c0_i32_0 = arith.constant 0 : i32
    %c0_i32_1 = arith.constant 0 : i32
    return %c0_i32, %c0_i32_0 : i32, i32
  }
  func.func @transform_3(%arg0: i32) -> (i32, i32) {
    %c0_i32 = arith.constant 0 : i32
    %c0_i32_0 = arith.constant 0 : i32
    %c0_i32_1 = arith.constant 0 : i32
    return %c0_i32, %c0_i32_0 : i32, i32
  }
  func.func @transform_4(%arg0: i32) -> (i32, i32) {
    %c0_i32 = arith.constant 0 : i32
    %c0_i32_0 = arith.constant 0 : i32
    %c0_i32_1 = arith.constant 0 : i32
    return %c0_i32, %c0_i32_0 : i32, i32
  }
  func.func @transform_5(%arg0: i32) -> (i32, i32) {
    %c0_i32 = arith.constant 0 : i32
    %c0_i32_0 = arith.constant 0 : i32
    return %arg0, %c0_i32 : i32, i32
  }
}

</mosaic_0001>

<llo_original>
// kernel: mlp_forward.1
$region0: #{mlp_forward.1}
  #allocation0 [shape = 'u32[]', space=smem, size = 0x4, offset = 0x4, fixed_abs, tag = 'smem constant byte address 0x4 - core index']
  #allocation1 [shape = 'u32[72,128]{1,0:T(1,128)}', space=vmem, size = 0x9000, scoped, tag = 'internal scratch']
  %s0 = inlined_call_operand.vmem [shape: f32[256,16], index: 0, kind: input, shape index: {}]
  %s1 = inlined_call_operand.vmem [shape: f32[16,32], index: 1, kind: input, shape index: {}]
  %s2 = inlined_call_operand.vmem [shape: f32[1,32], index: 2, kind: input, shape index: {}]
  %s3 = inlined_call_operand.vmem [shape: f32[32,2], index: 3, kind: input, shape index: {}]
  %s4 = inlined_call_operand.vmem [shape: f32[1,2], index: 4, kind: input, shape index: {}]
  %s5 = inlined_call_operand.vmem [shape: f32[256,2], index: 5, kind: output, shape index: {}]
  %s6 = sld [smem:[#allocation0]]
  $region53: #{mlp_forward.1} parent=0
    _
  %s8 = ssub.s32 1, %s6
  %s9 = scalar_select 0, %s8, %s6
  loop: start=0, step=1, limit=4
  $region2: #{mlp_forward.1} parent=0 // loop_pre_header
    _
  $region3: #{mlp_forward.1} parent=0 // loop_header
    %s11 = sphi 0, %s15
    %p12 = scmp.ge.s32.totalorder %s11, 4
    %s21 = sphi 0, %s23
    %s24 = sphi 0, %s21
    %s25 = sphi 0, %s24
    %s41 = sphi 0, %s25
    %s45 = sphi 0, %s45
    %s47 = sphi 0, %s45
    %s48 = sphi 0, %s47
    %s62 = sphi 0, %s48
    %s66 = sphi 0, %s66
    %s68 = sphi 0, %s66
    %s69 = sphi 0, %s68
    %s83 = sphi 0, %s69
    %s87 = sphi 0, %s87
    %s89 = sphi 0, %s87
    %s90 = sphi 0, %s89
    %s104 = sphi 0, %s90
    %s108 = sphi 0, %s108
    %s110 = sphi 0, %s108
    %s111 = sphi 0, %s110
    %s125 = sphi 0, %s111
    %s131 = sphi 0, %s133
    %s134 = sphi 0, %s131
    %s135 = sphi 0, %s134
    %s151 = sphi 0, %s135
  $region4: #{mlp_forward.1} parent=0 // loop_header_branch
    %14 = sbr.rel (%p12) target = $region8
  $region5: #{mlp_forward.1} parent=0 // loop_body
    %s16 = ssub.s32 %s11, 1
    %s17 = ssub.s32 %s11, 2
    %s18 = sadd.s32 %s11, 1
    %s19 = ssub.s32 %s11, %s18
    %p20 = scmp.eq.s32.totalorder %s19, 0
    %s22 = sadd.s32 %s21, 1
    %s23 = scalar_select %p20, %s21, %s22
    %p26 = pneg %p20
    %p27 = scmp.eq.s32.totalorder %s11, 1
    %p28 = por %p26, %p27
    %p29 = scmp.ne.s32.totalorder %s21, %s24
    %p30 = scmp.eq.s32.totalorder %s11, 0
    %p31 = por %p29, %p30
    %p32 = scmp.ne.s32.totalorder %s21, %s24
    %p33 = scmp.eq.s32.totalorder %s16, 1
    %p34 = por %p32, %p33
    %p35 = scmp.ne.s32.totalorder %s24, %s25
    %p36 = scmp.eq.s32.totalorder %s16, 0
    %p37 = por %p35, %p36
    %p38 = scmp.ne.s32.totalorder %s24, %s25
    %p39 = scmp.eq.s32.totalorder %s17, 1
    %p40 = por %p38, %p39
    %p42 = scmp.ne.s32.totalorder %s25, %s41
    %p43 = scmp.eq.s32.totalorder %s17, 0
    %p44 = por %p42, %p43
    %s46 = sadd.s32 %s45, 1
    %p49 = scmp.eq.s32.totalorder %s11, 1
    %p50 = scmp.ne.s32.totalorder %s45, %s47
    %p51 = scmp.eq.s32.totalorder %s11, 0
    %p52 = por %p50, %p51
    %p53 = scmp.ne.s32.totalorder %s45, %s47
    %p54 = scmp.eq.s32.totalorder %s16, 1
    %p55 = por %p53, %p54
    %p56 = scmp.ne.s32.totalorder %s47, %s48
    %p57 = scmp.eq.s32.totalorder %s16, 0
    %p58 = por %p56, %p57
    %p59 = scmp.ne.s32.totalorder %s47, %s48
    %p60 = scmp.eq.s32.totalorder %s17, 1
    %p61 = por %p59, %p60
    %p63 = scmp.ne.s32.totalorder %s48, %s62
    %p64 = scmp.eq.s32.totalorder %s17, 0
    %p65 = por %p63, %p64
    %s67 = sadd.s32 %s66, 1
    %p70 = scmp.eq.s32.totalorder %s11, 1
    %p71 = scmp.ne.s32.totalorder %s66, %s68
    %p72 = scmp.eq.s32.totalorder %s11, 0
    %p73 = por %p71, %p72
    %p74 = scmp.ne.s32.totalorder %s66, %s68
    %p75 = scmp.eq.s32.totalorder %s16, 1
    %p76 = por %p74, %p75
    %p77 = scmp.ne.s32.totalorder %s68, %s69
    %p78 = scmp.eq.s32.totalorder %s16, 0
    %p79 = por %p77, %p78
    %p80 = scmp.ne.s32.totalorder %s68, %s69
    %p81 = scmp.eq.s32.totalorder %s17, 1
    %p82 = por %p80, %p81
    %p84 = scmp.ne.s32.totalorder %s69, %s83
    %p85 = scmp.eq.s32.totalorder %s17, 0
    %p86 = por %p84, %p85
    %s88 = sadd.s32 %s87, 1
    %p91 = scmp.eq.s32.totalorder %s11, 1
    %p92 = scmp.ne.s32.totalorder %s87, %s89
    %p93 = scmp.eq.s32.totalorder %s11, 0
    %p94 = por %p92, %p93
    %p95 = scmp.ne.s32.totalorder %s87, %s89
    %p96 = scmp.eq.s32.totalorder %s16, 1
    %p97 = por %p95, %p96
    %p98 = scmp.ne.s32.totalorder %s89, %s90
    %p99 = scmp.eq.s32.totalorder %s16, 0
    %p100 = por %p98, %p99
    %p101 = scmp.ne.s32.totalorder %s89, %s90
    %p102 = scmp.eq.s32.totalorder %s17, 1
    %p103 = por %p101, %p102
    %p105 = scmp.ne.s32.totalorder %s90, %s104
    %p106 = scmp.eq.s32.totalorder %s17, 0
    %p107 = por %p105, %p106
    %s109 = sadd.s32 %s108, 1
    %p112 = scmp.eq.s32.totalorder %s11, 1
    %p113 = scmp.ne.s32.totalorder %s108, %s110
    %p114 = scmp.eq.s32.totalorder %s11, 0
    %p115 = por %p113, %p114
    %p116 = scmp.ne.s32.totalorder %s108, %s110
    %p117 = scmp.eq.s32.totalorder %s16, 1
    %p118 = por %p116, %p117
    %p119 = scmp.ne.s32.totalorder %s110, %s111
    %p120 = scmp.eq.s32.totalorder %s16, 0
    %p121 = por %p119, %p120
    %p122 = scmp.ne.s32.totalorder %s110, %s111
    %p123 = scmp.eq.s32.totalorder %s17, 1
    %p124 = por %p122, %p123
    %p126 = scmp.ne.s32.totalorder %s111, %s125
    %p127 = scmp.eq.s32.totalorder %s17, 0
    %p128 = por %p126, %p127
    %s129 = ssub.s32 %s11, %s18
    %p130 = scmp.eq.s32.totalorder %s129, 0
    %s132 = sadd.s32 %s131, 1
    %s133 = scalar_select %p130, %s131, %s132
    %p136 = pneg %p130
    %p137 = scmp.eq.s32.totalorder %s11, 1
    %p138 = por %p136, %p137
    %p139 = scmp.ne.s32.totalorder %s131, %s134
    %p140 = scmp.eq.s32.totalorder %s11, 0
    %p141 = por %p139, %p140
    %p142 = scmp.ne.s32.totalorder %s131, %s134
    %p143 = scmp.eq.s32.totalorder %s16, 1
    %p144 = por %p142, %p143
    %p145 = scmp.ne.s32.totalorder %s134, %s135
    %p146 = scmp.eq.s32.totalorder %s16, 0
    %p147 = por %p145, %p146
    %p148 = scmp.ne.s32.totalorder %s134, %s135
    %p149 = scmp.eq.s32.totalorder %s17, 1
    %p150 = por %p148, %p149
    %p152 = scmp.ne.s32.totalorder %s135, %s151
    %p153 = scmp.eq.s32.totalorder %s17, 0
    %p154 = por %p152, %p153
    %p155 = scmp.le.s32.totalorder 1, %s11
    %p156 = scmp.lt.s32.totalorder %s11, 3
    %p157 = pnand %p155, %p156
    %p158 = pneg %p157
    // Predicated region
    $region9: #{mlp_forward.1} parent=5 // pred_check
      _
    $region10: #{mlp_forward.1} parent=5 // pred_check_branch
      %160 = sbr.rel (%p157) target = $region12
    $region11: #{mlp_forward.1} parent=5 // pred_region
      %s161 = ssub.s32 %s11, 1
      // Predicated region
      $region13: #{mlp_forward.1} parent=11 // pred_check
        %p162 = pneg %p58
      $region14: #{mlp_forward.1} parent=11 // pred_check_branch
        %164 = sbr.rel (%p162) target = $region16
      $region15: #{mlp_forward.1} parent=11 // pred_region
        _
      $region16: #{mlp_forward.1} parent=11 // pred_fallthru
        _
      // Predicated region
      $region17: #{mlp_forward.1} parent=11 // pred_check
        %p165 = pneg %p79
      $region18: #{mlp_forward.1} parent=11 // pred_check_branch
        %167 = sbr.rel (%p165) target = $region20
      $region19: #{mlp_forward.1} parent=11 // pred_region
        _
      $region20: #{mlp_forward.1} parent=11 // pred_fallthru
        _
      // Predicated region
      $region21: #{mlp_forward.1} parent=11 // pred_check
        %p168 = pneg %p100
      $region22: #{mlp_forward.1} parent=11 // pred_check_branch
        %170 = sbr.rel (%p168) target = $region24
      $region23: #{mlp_forward.1} parent=11 // pred_region
        _
      $region24: #{mlp_forward.1} parent=11 // pred_fallthru
        _
      // Predicated region
      $region25: #{mlp_forward.1} parent=11 // pred_check
        %p171 = pneg %p121
      $region26: #{mlp_forward.1} parent=11 // pred_check_branch
        %173 = sbr.rel (%p171) target = $region28
      $region27: #{mlp_forward.1} parent=11 // pred_region
        _
      $region28: #{mlp_forward.1} parent=11 // pred_fallthru
        _
    $region12: #{mlp_forward.1} parent=5 // pred_fallthru
      _
    %p174 = scmp.lt.s32.totalorder %s11, 2
    // Predicated region
    $region29: #{mlp_forward.1} parent=5 // pred_check
      %p175 = pneg %p174
    $region30: #{mlp_forward.1} parent=5 // pred_check_branch
      %177 = sbr.rel (%p175) target = $region32
    $region31: #{mlp_forward.1} parent=5 // pred_region
      // Predicated region
      $region33: #{mlp_forward.1} parent=31 // pred_check
        %p178 = pneg %p31
      $region34: #{mlp_forward.1} parent=31 // pred_check_branch
        %180 = sbr.rel (%p178) target = $region36
      $region35: #{mlp_forward.1} parent=31 // pred_region
        %s181 = smul.u32 16, %s11
        %p182 = scmp.lt.s32.totalorder %s181, 31
        %s183 = scalar_select %p182, %s181, 31
        %s184 = smul.addr %s183, 8
        %s185 = scalar_lea.vmem %s0, %s184
        %s186 = smul.u32 16, %s11
      $region36: #{mlp_forward.1} parent=31 // pred_fallthru
        _
    $region32: #{mlp_forward.1} parent=5 // pred_fallthru
      _
    %p187 = scmp.le.s32.totalorder 1, %s11
    %p188 = scmp.lt.s32.totalorder %s11, 3
    %p189 = pnand %p187, %p188
    %p190 = pneg %p189
    // Predicated region
    $region37: #{mlp_forward.1} parent=5 // pred_check
      _
    $region38: #{mlp_forward.1} parent=5 // pred_check_branch
      %192 = sbr.rel (%p189) target = $region40
    $region39: #{mlp_forward.1} parent=5 // pred_region
      %s193 = ssub.s32 %s11, 1
      %s194 = smul.u32 16, %s16
      %p195 = scmp.lt.s32.totalorder %s194, 31
      %s196 = scalar_select %p195, %s194, 31
      %s197 = smul.addr %s196, 8
      %s198 = scalar_lea.vmem %s0, %s197
      %p199 = pneg %p37
      %p200 = pneg %p34
      %p201 = pneg %p58
      %p202 = pneg %p55
      %p203 = pneg %p79
      %p204 = pneg %p76
      %p205 = pneg %p100
      %p206 = pneg %p97
      %p207 = pneg %p121
      %p208 = pneg %p118
      %p209 = pneg %p147
      %p210 = pneg %p144
      %s211 = smul.u32 16, %s16
      %p212 = scmp.lt.s32.totalorder %s211, 31
      %s213 = scalar_select %p212, %s211, 31
      %s214 = smul.addr %s213, 8
      %s215 = scalar_lea.vmem %s5, %s214
      %s216 = smul.u32 16, %s16
      %p217 = scmp.lt.s32.totalorder %s216, 31
      %s218 = scalar_select %p217, %s216, 31
      %s219 = smul.addr %s218, 8
      %s220 = scalar_lea.vmem %s0, %s219
      %s221 = smul.u32 16, %s16
      %s222 = smul.u32 16, %s16
      %p223 = scmp.lt.s32.totalorder %s222, 31
      %s224 = scalar_select %p223, %s222, 31
      %s225 = smul.addr %s224, 8
      %s226 = scalar_lea.vmem %s5, %s225
      %s227 = smul.u32 16, %s16
      %v228 = vld [vmem:[%s220] sm:$0xff]
      %v229 = vld [vmem:[%s220 + $0x8] sm:$0xff]
      %v230 = vld [vmem:[%s220 + $0x10] sm:$0xff]
      %v231 = vld [vmem:[%s220 + $0x18] sm:$0xff]
      %v232 = vld [vmem:[%s220 + $0x20] sm:$0xff]
      %v233 = vld [vmem:[%s220 + $0x28] sm:$0xff]
      %v234 = vld [vmem:[%s220 + $0x30] sm:$0xff]
      %v235 = vld [vmem:[%s220 + $0x38] sm:$0xff]
      %v236 = vld [vmem:[%s220 + $0x40] sm:$0xff]
      %v237 = vld [vmem:[%s220 + $0x48] sm:$0xff]
      %v238 = vld [vmem:[%s220 + $0x50] sm:$0xff]
      %v239 = vld [vmem:[%s220 + $0x58] sm:$0xff]
      %v240 = vld [vmem:[%s220 + $0x60] sm:$0xff]
      %v241 = vld [vmem:[%s220 + $0x68] sm:$0xff]
      %v242 = vld [vmem:[%s220 + $0x70] sm:$0xff]
      %v243 = vld [vmem:[%s220 + $0x78] sm:$0xff]
      %v244 = vld [vmem:[%s1] sm:$0xff]
      %v245 = vld [vmem:[%s1 + $0x8] sm:$0xff]
      %v246 = vld [vmem:[%s2] sm:$0x1]
      %v248 = vperm.slane %v246, 0
      %vm250 = vcmask 130048
      %v252 = vsel %vm250, %v228, 0
      %v255 = vsel %vm250, %v229, 0
      %v258 = vsel %vm250, %v230, 0
      %v261 = vsel %vm250, %v231, 0
      %v264 = vsel %vm250, %v232, 0
      %v267 = vsel %vm250, %v233, 0
      %v270 = vsel %vm250, %v234, 0
      %v273 = vsel %vm250, %v235, 0
      %v276 = vsel %vm250, %v236, 0
      %v279 = vsel %vm250, %v237, 0
      %v282 = vsel %vm250, %v238, 0
      %v285 = vsel %vm250, %v239, 0
      %v288 = vsel %vm250, %v240, 0
      %v291 = vsel %vm250, %v241, 0
      %v294 = vsel %vm250, %v242, 0
      %v297 = vsel %vm250, %v243, 0
      %299 = vmatpush.msra.mxu0 0.0
      %300 = vmatpush.msra.mxu0 0.0
      %301 = vmatpush.msra.mxu0 0.0
      %302 = vmatpush.msra.mxu0 0.0
      %303 = vmatpush.msra.mxu0 0.0
      %304 = vmatpush.msra.mxu0 0.0
      %305 = vmatpush.msra.mxu0 0.0
      %306 = vmatpush.msra.mxu0 0.0
      %307 = vmatpush.msra.mxu0 0.0
      %308 = vmatpush.msra.mxu0 0.0
      %309 = vmatpush.msra.mxu0 0.0
      %310 = vmatpush.msra.mxu0 0.0
      %311 = vmatpush.msra.mxu0 0.0
      %312 = vmatpush.msra.mxu0 0.0
      %313 = vmatpush.msra.mxu0 %v245
      %314 = vmatpush.msra.mxu0 %v244
      %315 = vmatmul.f32.gmra.mxu0 %v252
      %v316 = vpop.f32.mrf.mxu0
      %v317 = vadd.f32 %v248, %v316
      %318 = vmatmul.f32.gmra.mxu0 %v255
      %v319 = vpop.f32.mrf.mxu0
      %v320 = vadd.f32 %v248, %v319
      %321 = vmatmul.f32.gmra.mxu0 %v258
      %v322 = vpop.f32.mrf.mxu0
      %v323 = vadd.f32 %v248, %v322
      %324 = vmatmul.f32.gmra.mxu0 %v261
      %v325 = vpop.f32.mrf.mxu0
      %v326 = vadd.f32 %v248, %v325
      %327 = vmatmul.f32.gmra.mxu0 %v264
      %v328 = vpop.f32.mrf.mxu0
      %v329 = vadd.f32 %v248, %v328
      %330 = vmatmul.f32.gmra.mxu0 %v267
      %v331 = vpop.f32.mrf.mxu0
      %v332 = vadd.f32 %v248, %v331
      %333 = vmatmul.f32.gmra.mxu0 %v270
      %v334 = vpop.f32.mrf.mxu0
      %v335 = vadd.f32 %v248, %v334
      %336 = vmatmul.f32.gmra.mxu0 %v273
      %v337 = vpop.f32.mrf.mxu0
      %v338 = vadd.f32 %v248, %v337
      %339 = vmatmul.f32.gmra.mxu0 %v276
      %v340 = vpop.f32.mrf.mxu0
      %v341 = vadd.f32 %v248, %v340
      %342 = vmatmul.f32.gmra.mxu0 %v279
      %v343 = vpop.f32.mrf.mxu0
      %v344 = vadd.f32 %v248, %v343
      %345 = vmatmul.f32.gmra.mxu0 %v282
      %v346 = vpop.f32.mrf.mxu0
      %v347 = vadd.f32 %v248, %v346
      %348 = vmatmul.f32.gmra.mxu0 %v285
      %v349 = vpop.f32.mrf.mxu0
      %v350 = vadd.f32 %v248, %v349
      %351 = vmatmul.f32.gmra.mxu0 %v288
      %v352 = vpop.f32.mrf.mxu0
      %v353 = vadd.f32 %v248, %v352
      %354 = vmatmul.f32.gmra.mxu0 %v291
      %v355 = vpop.f32.mrf.mxu0
      %v356 = vadd.f32 %v248, %v355
      %357 = vmatmul.f32.gmra.mxu0 %v294
      %v358 = vpop.f32.mrf.mxu0
      %v359 = vadd.f32 %v248, %v358
      %360 = vmatmul.f32.gmra.mxu0 %v297
      %v361 = vpop.f32.mrf.mxu0
      %v362 = vadd.f32 %v248, %v361
      %363 = vdwg.mxu0
      %v364 = vmax.f32 %v317, 0.0
      %v365 = vmax.f32 %v320, 0.0
      %v366 = vmax.f32 %v323, 0.0
      %v367 = vmax.f32 %v326, 0.0
      %v368 = vmax.f32 %v329, 0.0
      %v369 = vmax.f32 %v332, 0.0
      %v370 = vmax.f32 %v335, 0.0
      %v371 = vmax.f32 %v338, 0.0
      %v372 = vmax.f32 %v341, 0.0
      %v373 = vmax.f32 %v344, 0.0
      %v374 = vmax.f32 %v347, 0.0
      %v375 = vmax.f32 %v350, 0.0
      %v376 = vmax.f32 %v353, 0.0
      %v377 = vmax.f32 %v356, 0.0
      %v378 = vmax.f32 %v359, 0.0
      %v379 = vmax.f32 %v362, 0.0
      %v380 = vld [vmem:[%s3] sm:$0xff]
      %v381 = vld [vmem:[%s3 + $0x8] sm:$0xff]
      %v382 = vld [vmem:[%s3 + $0x10] sm:$0xff]
      %v383 = vld [vmem:[%s3 + $0x18] sm:$0xff]
      %v384 = vld [vmem:[%s4] sm:$0x1]
      %v386 = vperm.slane %v384, 0
      %vm388 = vcmask 261120
      %v390 = vsel %vm388, %v364, 0
      %v393 = vsel %vm388, %v365, 0
      %v396 = vsel %vm388, %v366, 0
      %v399 = vsel %vm388, %v367, 0
      %v402 = vsel %vm388, %v368, 0
      %v405 = vsel %vm388, %v369, 0
      %v408 = vsel %vm388, %v370, 0
      %v411 = vsel %vm388, %v371, 0
      %v414 = vsel %vm388, %v372, 0
      %v417 = vsel %vm388, %v373, 0
      %v420 = vsel %vm388, %v374, 0
      %v423 = vsel %vm388, %v375, 0
      %v426 = vsel %vm388, %v376, 0
      %v429 = vsel %vm388, %v377, 0
      %v432 = vsel %vm388, %v378, 0
      %v435 = vsel %vm388, %v379, 0
      %437 = vmatpush.msra.mxu0 0.0
      %438 = vmatpush.msra.mxu0 0.0
      %439 = vmatpush.msra.mxu0 0.0
      %440 = vmatpush.msra.mxu0 0.0
      %441 = vmatpush.msra.mxu0 0.0
      %442 = vmatpush.msra.mxu0 0.0
      %443 = vmatpush.msra.mxu0 0.0
      %444 = vmatpush.msra.mxu0 0.0
      %445 = vmatpush.msra.mxu0 0.0
      %446 = vmatpush.msra.mxu0 0.0
      %447 = vmatpush.msra.mxu0 0.0
      %448 = vmatpush.msra.mxu0 0.0
      %449 = vmatpush.msra.mxu0 %v383
      %450 = vmatpush.msra.mxu0 %v382
      %451 = vmatpush.msra.mxu0 %v381
      %452 = vmatpush.msra.mxu0 %v380
      %453 = vmatmul.f32.gmra.mxu0 %v390
      %v454 = vpop.f32.mrf.mxu0
      %v455 = vadd.f32 %v386, %v454
      %456 = vmatmul.f32.gmra.mxu0 %v393
      %v457 = vpop.f32.mrf.mxu0
      %v458 = vadd.f32 %v386, %v457
      %459 = vmatmul.f32.gmra.mxu0 %v396
      %v460 = vpop.f32.mrf.mxu0
      %v461 = vadd.f32 %v386, %v460
      %462 = vmatmul.f32.gmra.mxu0 %v399
      %v463 = vpop.f32.mrf.mxu0
      %v464 = vadd.f32 %v386, %v463
      %465 = vmatmul.f32.gmra.mxu0 %v402
      %v466 = vpop.f32.mrf.mxu0
      %v467 = vadd.f32 %v386, %v466
      %468 = vmatmul.f32.gmra.mxu0 %v405
      %v469 = vpop.f32.mrf.mxu0
      %v470 = vadd.f32 %v386, %v469
      %471 = vmatmul.f32.gmra.mxu0 %v408
      %v472 = vpop.f32.mrf.mxu0
      %v473 = vadd.f32 %v386, %v472
      %474 = vmatmul.f32.gmra.mxu0 %v411
      %v475 = vpop.f32.mrf.mxu0
      %v476 = vadd.f32 %v386, %v475
      %477 = vmatmul.f32.gmra.mxu0 %v414
      %v478 = vpop.f32.mrf.mxu0
      %v479 = vadd.f32 %v386, %v478
      %480 = vmatmul.f32.gmra.mxu0 %v417
      %v481 = vpop.f32.mrf.mxu0
      %v482 = vadd.f32 %v386, %v481
      %483 = vmatmul.f32.gmra.mxu0 %v420
      %v484 = vpop.f32.mrf.mxu0
      %v485 = vadd.f32 %v386, %v484
      %486 = vmatmul.f32.gmra.mxu0 %v423
      %v487 = vpop.f32.mrf.mxu0
      %v488 = vadd.f32 %v386, %v487
      %489 = vmatmul.f32.gmra.mxu0 %v426
      %v490 = vpop.f32.mrf.mxu0
      %v491 = vadd.f32 %v386, %v490
      %492 = vmatmul.f32.gmra.mxu0 %v429
      %v493 = vpop.f32.mrf.mxu0
      %v494 = vadd.f32 %v386, %v493
      %495 = vmatmul.f32.gmra.mxu0 %v432
      %v496 = vpop.f32.mrf.mxu0
      %v497 = vadd.f32 %v386, %v496
      %498 = vmatmul.f32.gmra.mxu0 %v435
      %v499 = vpop.f32.mrf.mxu0
      %v500 = vadd.f32 %v386, %v499
      %501 = vdwg.mxu0
      %vm502 = vcmask 15360
      %503 = vst.msk [vmem:[%s226] sm:$0xff] %vm502, %v455
      %504 = vst.msk [vmem:[%s226 + $0x8] sm:$0xff] %vm502, %v458
      %505 = vst.msk [vmem:[%s226 + $0x10] sm:$0xff] %vm502, %v461
      %506 = vst.msk [vmem:[%s226 + $0x18] sm:$0xff] %vm502, %v464
      %507 = vst.msk [vmem:[%s226 + $0x20] sm:$0xff] %vm502, %v467
      %508 = vst.msk [vmem:[%s226 + $0x28] sm:$0xff] %vm502, %v470
      %509 = vst.msk [vmem:[%s226 + $0x30] sm:$0xff] %vm502, %v473
      %510 = vst.msk [vmem:[%s226 + $0x38] sm:$0xff] %vm502, %v476
      %511 = vst.msk [vmem:[%s226 + $0x40] sm:$0xff] %vm502, %v479
      %512 = vst.msk [vmem:[%s226 + $0x48] sm:$0xff] %vm502, %v482
      %513 = vst.msk [vmem:[%s226 + $0x50] sm:$0xff] %vm502, %v485
      %514 = vst.msk [vmem:[%s226 + $0x58] sm:$0xff] %vm502, %v488
      %515 = vst.msk [vmem:[%s226 + $0x60] sm:$0xff] %vm502, %v491
      %516 = vst.msk [vmem:[%s226 + $0x68] sm:$0xff] %vm502, %v494
      %517 = vst.msk [vmem:[%s226 + $0x70] sm:$0xff] %vm502, %v497
      %518 = vst.msk [vmem:[%s226 + $0x78] sm:$0xff] %vm502, %v500
      %s519 = smul.u32 16, %s16
      %p520 = scmp.lt.s32.totalorder %s519, 31
      %s521 = scalar_select %p520, %s519, 31
      %s522 = smul.addr %s521, 8
      %s523 = scalar_lea.vmem %s5, %s522
      // Predicated region
      $region41: #{mlp_forward.1} parent=39 // pred_check
        %p524 = pneg %p144
      $region42: #{mlp_forward.1} parent=39 // pred_check_branch
        %526 = sbr.rel (%p524) target = $region44
      $region43: #{mlp_forward.1} parent=39 // pred_region
        %s527 = smul.u32 16, %s16
      $region44: #{mlp_forward.1} parent=39 // pred_fallthru
        _
    $region40: #{mlp_forward.1} parent=5 // pred_fallthru
      _
    %p528 = scmp.le.s32.totalorder 2, %s11
    // Predicated region
    $region45: #{mlp_forward.1} parent=5 // pred_check
      %p529 = pneg %p528
    $region46: #{mlp_forward.1} parent=5 // pred_check_branch
      %531 = sbr.rel (%p529) target = $region48
    $region47: #{mlp_forward.1} parent=5 // pred_region
      %s532 = ssub.s32 %s11, 2
      // Predicated region
      $region49: #{mlp_forward.1} parent=47 // pred_check
        %p533 = pneg %p150
      $region50: #{mlp_forward.1} parent=47 // pred_check_branch
        %535 = sbr.rel (%p533) target = $region52
      $region51: #{mlp_forward.1} parent=47 // pred_region
        %s536 = smul.u32 16, %s17
        %p537 = scmp.lt.s32.totalorder %s536, 31
        %s538 = scalar_select %p537, %s536, 31
        %s539 = smul.addr %s538, 8
        %s540 = scalar_lea.vmem %s5, %s539
      $region52: #{mlp_forward.1} parent=47 // pred_fallthru
        _
    $region48: #{mlp_forward.1} parent=5 // pred_fallthru
      _
  $region6: #{mlp_forward.1} parent=0 // loop_footer
    %s15 = sadd.s32 1, %s11
  $region7: #{mlp_forward.1} parent=0 // loop_footer_branch
    %10 = sbr.rel target = $region3
  $region8: #{mlp_forward.1} parent=0 // loop_exit
    _

</llo_original>
